<compile_context>
chip_gen: v5e
topology: v5e:2x2
jax: 0.10.0
libtpu: 0.0.40
codegen_flags: <defaults>
</compile_context>

<pallas_src>
import jax
import jax.numpy as jnp
from jax.experimental import pallas as pl
from jax.experimental.pallas import tpu as pltpu

N_USERS = 500
N_ITEMS = 300
N_FACTORS = 10
MLP_LAYERS = [20, 10]      # Linear(2F,20) ReLU Drop, Linear(20,10) ReLU Drop
LANE = 128
MAX_TILE_B = 2048


def ncf_kernel(ue_ref, ie_ref,
               w1u_ref, w1i_ref, b1_ref, w2_ref, b2_ref, wo_ref, bo_ref,
               out_ref):
    # ---- MLP layer 1: split-weight partial matmuls replace concat(u, i) -----
    # ue/ie are (F, TB) feature-major embedding tiles gathered in the wrapper.
    h = (jnp.dot(w1u_ref[...], ue_ref[...], preferred_element_type=jnp.float32)
         + jnp.dot(w1i_ref[...], ie_ref[...], preferred_element_type=jnp.float32)
         + b1_ref[...])                                                  # (20, TB)
    h = jnp.maximum(h, 0.0)   # ReLU; Dropout(0.1) == identity at inference

    # ---- MLP layer 2 ---------------------------------------------------------
    h = jnp.dot(w2_ref[...], h, preferred_element_type=jnp.float32) + b2_ref[...]
    h = jnp.maximum(h, 0.0)                                              # (10, TB)

    # ---- output layer Linear(10 -> 1), written lane-dense as (1, TB) --------
    out_ref[...] = (jnp.sum(h * wo_ref[...], axis=0, keepdims=True)
                    + bo_ref[...])                                       # (1, TB)


def init_params(key):
    """Deterministic init matching the PyTorch module's _init_weights,
    stored in the kernel's feature-major layout."""
    ks = jax.random.split(key, 5)

    def xavier(k, fan_out, fan_in):
        # nn.init.xavier_uniform_ on a torch (out, in) Linear weight
        bound = (6.0 / (fan_in + fan_out)) ** 0.5
        return jax.random.uniform(k, (fan_out, fan_in), jnp.float32, -bound, bound)

    # nn.Embedding weights (rows, F), normal std=0.01 (natural row-major layout;
    # the gather happens in the wrapper, not in the kernel).
    user_tab = 0.01 * jax.random.normal(ks[0], (N_USERS, N_FACTORS), jnp.float32)
    item_tab = 0.01 * jax.random.normal(ks[1], (N_ITEMS, N_FACTORS), jnp.float32)

    # Linear(2F -> 20): torch weight (20, 2F); split along the input axis so the
    # kernel never concatenates [user_emb, item_emb] on the lane axis.
    w1 = xavier(ks[2], MLP_LAYERS[0], 2 * N_FACTORS)   # (20, 20)
    w2 = xavier(ks[3], MLP_LAYERS[1], MLP_LAYERS[0])   # (10, 20)
    wo = xavier(ks[4], 1, MLP_LAYERS[1])               # (1, 10)

    return {
        "user_table": user_tab,                        # (n_users, F)
        "item_table": item_tab,                        # (n_items, F)
        "w1_user": w1[:, :N_FACTORS],                  # (20, F) acts on user_emb
        "w1_item": w1[:, N_FACTORS:],                  # (20, F) acts on item_emb
        "b1": jnp.zeros((MLP_LAYERS[0], 1), jnp.float32),
        "w2": w2,                                      # (10, 20)
        "b2": jnp.zeros((MLP_LAYERS[1], 1), jnp.float32),
        "wo": wo.T,                                    # (10, 1) column vector
        "bo": jnp.zeros((1, 1), jnp.float32),
    }


def ncf_forward(params, user_idx, item_idx):
    B = user_idx.shape[0]

    # Lane-aligned padded batch; ensure >= 2 grid steps when possible so the
    # "parallel" grid axis feeds both TensorCores on v7x.
    b_lanes = pl.cdiv(B, LANE) * LANE
    if b_lanes >= 2 * LANE:
        tile_b = max(LANE, min(MAX_TILE_B, (b_lanes // 2 // LANE) * LANE))
    else:
        tile_b = b_lanes
    b_pad = pl.cdiv(b_lanes, tile_b) * tile_b
    grid = (b_pad // tile_b,)

    # ---- embedding gathers hoisted to XLA (10-wide rows, feature-major) -----
    u = jnp.zeros((b_pad,), jnp.int32).at[:B].set(user_idx.astype(jnp.int32))
    i = jnp.zeros((b_pad,), jnp.int32).at[:B].set(item_idx.astype(jnp.int32))
    u_emb_t = params["user_table"][u].T                # (F, b_pad)
    i_emb_t = params["item_table"][i].T                # (F, b_pad)

    emb_spec = pl.BlockSpec((N_FACTORS, tile_b), lambda g: (0, g))
    out_spec = pl.BlockSpec((1, tile_b), lambda g: (0, g))

    def resident(a):  # whole-array block, VMEM-resident across the batch grid
        return pl.BlockSpec(a.shape, lambda g: (0, 0))

    out = pl.pallas_call(
        ncf_kernel,
        out_shape=jax.ShapeDtypeStruct((1, b_pad), jnp.float32),
        grid=grid,
        in_specs=[
            emb_spec, emb_spec,
            resident(params["w1_user"]), resident(params["w1_item"]),
            resident(params["b1"]),
            resident(params["w2"]), resident(params["b2"]),
            resident(params["wo"]), resident(params["bo"]),
        ],
        out_specs=out_spec,
        compiler_params=pltpu.CompilerParams(
            dimension_semantics=("parallel",)),
    )(u_emb_t, i_emb_t,
      params["w1_user"], params["w1_item"], params["b1"],
      params["w2"], params["b2"], params["wo"], params["bo"])

    # matches torch `output.squeeze()`: (B,) for B>1, scalar for B==1
    return jnp.squeeze(out[0, :B])


if __name__ == "__main__":
    key = jax.random.PRNGKey(0)
    pkey, ukey, ikey = jax.random.split(key, 3)

    params = init_params(pkey)

    B = 8
    user_idx = jax.random.randint(ukey, (B,), 0, N_USERS, dtype=jnp.int32)
    item_idx = jax.random.randint(ikey, (B,), 0, N_ITEMS, dtype=jnp.int32)

    out = ncf_forward(params, user_idx, item_idx)
    out = jax.block_until_ready(out)
    assert out.shape == (B,), out.shape

    # plain-JAX reference check of the fused kernel
    u_emb = params["user_table"][user_idx]                           # (B, F)
    i_emb = params["item_table"][item_idx]                           # (B, F)
    x = jnp.concatenate([u_emb, i_emb], axis=1)                      # (B, 2F)
    w1_full = jnp.concatenate([params["w1_user"], params["w1_item"]], axis=1)
    h = jnp.maximum(x @ w1_full.T + params["b1"][:, 0], 0.0)
    h = jnp.maximum(h @ params["w2"].T + params["b2"][:, 0], 0.0)
    ref = jnp.squeeze(h @ params["wo"] + params["bo"][0, 0])
    assert jnp.allclose(out, ref, rtol=1e-4, atol=1e-5), (out, ref)

    print("KERNEL_OK")
</pallas_src>

<mosaic_0001>
module attributes {stable_mosaic.version = 11 : i64} {
  func.func @ncf_kernel(%arg0: i32, %arg1: memref<10x128xf32, #tpu.memory_space<vmem>>, %arg2: memref<10x128xf32, #tpu.memory_space<vmem>>, %arg3: memref<20x10xf32, #tpu.memory_space<vmem>>, %arg4: memref<20x10xf32, #tpu.memory_space<vmem>>, %arg5: memref<20x1xf32, #tpu.memory_space<vmem>>, %arg6: memref<10x20xf32, #tpu.memory_space<vmem>>, %arg7: memref<10x1xf32, #tpu.memory_space<vmem>>, %arg8: memref<10x1xf32, #tpu.memory_space<vmem>>, %arg9: memref<1x1xf32, #tpu.memory_space<vmem>>, %arg10: memref<1x128xf32, #tpu.memory_space<vmem>>) attributes {dimension_semantics = [#tpu.dimension_semantics<parallel>], iteration_bounds = array<i64: 1>, scalar_prefetch = 0 : i64, scratch_operands = 0 : i64, tpu.core_type = #tpu.core_type<tc>, window_params = [{transform_indices = @transform_0, window_bounds = array<i64: 10, 128>}, {transform_indices = @transform_1, window_bounds = array<i64: 10, 128>}, {pipeline_mode = #tpu.pipeline_mode<synchronous>, transform_indices = @transform_2, window_bounds = array<i64: 20, 10>}, {pipeline_mode = #tpu.pipeline_mode<synchronous>, transform_indices = @transform_3, window_bounds = array<i64: 20, 10>}, {pipeline_mode = #tpu.pipeline_mode<synchronous>, transform_indices = @transform_4, window_bounds = array<i64: 20, 1>}, {pipeline_mode = #tpu.pipeline_mode<synchronous>, transform_indices = @transform_5, window_bounds = array<i64: 10, 20>}, {pipeline_mode = #tpu.pipeline_mode<synchronous>, transform_indices = @transform_6, window_bounds = array<i64: 10, 1>}, {pipeline_mode = #tpu.pipeline_mode<synchronous>, transform_indices = @transform_7, window_bounds = array<i64: 10, 1>}, {pipeline_mode = #tpu.pipeline_mode<synchronous>, transform_indices = @transform_8, window_bounds = array<i64: 1, 1>}, {transform_indices = @transform_9, window_bounds = array<i64: 1, 128>}]} {
    %c0 = arith.constant 0 : index
    %c0_0 = arith.constant 0 : index
    %0 = vector.load %arg3[%c0, %c0_0] : memref<20x10xf32, #tpu.memory_space<vmem>>, vector<20x10xf32>
    %c0_1 = arith.constant 0 : index
    %c0_2 = arith.constant 0 : index
    %1 = vector.load %arg1[%c0_1, %c0_2] : memref<10x128xf32, #tpu.memory_space<vmem>>, vector<10x128xf32>
    %cst = arith.constant dense<0.000000e+00> : vector<20x128xf32>
    %2 = tpu.matmul %0, %1, %cst {dimension_numbers = #tpu.dot_dimension_numbers<[1], [0], [0], [1], [0, 0, 1, 1], [], []>} : vector<20x10xf32>, vector<10x128xf32>, vector<20x128xf32> -> vector<20x128xf32>
    %c0_3 = arith.constant 0 : index
    %c0_4 = arith.constant 0 : index
    %3 = vector.load %arg4[%c0_3, %c0_4] : memref<20x10xf32, #tpu.memory_space<vmem>>, vector<20x10xf32>
    %c0_5 = arith.constant 0 : index
    %c0_6 = arith.constant 0 : index
    %4 = vector.load %arg2[%c0_5, %c0_6] : memref<10x128xf32, #tpu.memory_space<vmem>>, vector<10x128xf32>
    %cst_7 = arith.constant dense<0.000000e+00> : vector<20x128xf32>
    %5 = tpu.matmul %3, %4, %cst_7 {dimension_numbers = #tpu.dot_dimension_numbers<[1], [0], [0], [1], [0, 0, 1, 1], [], []>} : vector<20x10xf32>, vector<10x128xf32>, vector<20x128xf32> -> vector<20x128xf32>
    %6 = arith.addf %2, %5 : vector<20x128xf32>
    %c0_8 = arith.constant 0 : index
    %c0_9 = arith.constant 0 : index
    %7 = vector.load %arg5[%c0_8, %c0_9] : memref<20x1xf32, #tpu.memory_space<vmem>>, vector<20x1xf32>
    %8 = vector.broadcast %7 : vector<20x1xf32> to vector<20x128xf32>
    %9 = arith.addf %6, %8 : vector<20x128xf32>
    %cst_10 = arith.constant 0.000000e+00 : f32
    %10 = vector.broadcast %cst_10 : f32 to vector<20x128xf32>
    %11 = arith.maximumf %9, %10 : vector<20x128xf32>
    %c0_11 = arith.constant 0 : index
    %c0_12 = arith.constant 0 : index
    %12 = vector.load %arg6[%c0_11, %c0_12] : memref<10x20xf32, #tpu.memory_space<vmem>>, vector<10x20xf32>
    %cst_13 = arith.constant dense<0.000000e+00> : vector<10x128xf32>
    %13 = tpu.matmul %12, %11, %cst_13 {dimension_numbers = #tpu.dot_dimension_numbers<[1], [0], [0], [1], [0, 0, 1, 1], [], []>} : vector<10x20xf32>, vector<20x128xf32>, vector<10x128xf32> -> vector<10x128xf32>
    %c0_14 = arith.constant 0 : index
    %c0_15 = arith.constant 0 : index
    %14 = vector.load %arg7[%c0_14, %c0_15] : memref<10x1xf32, #tpu.memory_space<vmem>>, vector<10x1xf32>
    %15 = vector.broadcast %14 : vector<10x1xf32> to vector<10x128xf32>
    %16 = arith.addf %13, %15 : vector<10x128xf32>
    %cst_16 = arith.constant 0.000000e+00 : f32
    %17 = vector.broadcast %cst_16 : f32 to vector<10x128xf32>
    %18 = arith.maximumf %16, %17 : vector<10x128xf32>
    %c0_17 = arith.constant 0 : index
    %c0_18 = arith.constant 0 : index
    %19 = vector.load %arg8[%c0_17, %c0_18] : memref<10x1xf32, #tpu.memory_space<vmem>>, vector<10x1xf32>
    %20 = vector.broadcast %19 : vector<10x1xf32> to vector<10x128xf32>
    %21 = arith.mulf %18, %20 : vector<10x128xf32>
    %cst_19 = arith.constant dense<0.000000e+00> : vector<128xf32>
    %22 = vector.multi_reduction <add>, %21, %cst_19 [0] : vector<10x128xf32> to vector<128xf32>
    %23 = vector.shape_cast %22 : vector<128xf32> to vector<1x128xf32>
    %c0_20 = arith.constant 0 : index
    %c0_21 = arith.constant 0 : index
    %24 = vector.load %arg9[%c0_20, %c0_21] : memref<1x1xf32, #tpu.memory_space<vmem>>, vector<1x1xf32>
    %25 = vector.broadcast %24 : vector<1x1xf32> to vector<1x128xf32>
    %26 = arith.addf %23, %25 : vector<1x128xf32>
    %c0_22 = arith.constant 0 : index
    %c0_23 = arith.constant 0 : index
    %27 = vector.load %arg10[%c0_22, %c0_23] : memref<1x128xf32, #tpu.memory_space<vmem>>, vector<1x128xf32>
    tpu.vector_store %arg10[%c0_22, %c0_23], %26 {strides = array<i32>} : memref<1x128xf32, #tpu.memory_space<vmem>>, vector<1x128xf32>,
    return
  }
  func.func @transform_0(%arg0: i32) -> (i32, i32) {
    %c0_i32 = arith.constant 0 : i32
    %c0_i32_0 = arith.constant 0 : i32
    return %c0_i32, %arg0 : i32, i32
  }
  func.func @transform_1(%arg0: i32) -> (i32, i32) {
    %c0_i32 = arith.constant 0 : i32
    %c0_i32_0 = arith.constant 0 : i32
    return %c0_i32, %arg0 : i32, i32
  }
  func.func @transform_2(%arg0: i32) -> (i32, i32) {
    %c0_i32 = arith.constant 0 : i32
    %c0_i32_0 = arith.constant 0 : i32
    %c0_i32_1 = arith.constant 0 : i32
    return %c0_i32, %c0_i32_0 : i32, i32
  }
  func.func @transform_3(%arg0: i32) -> (i32, i32) {
    %c0_i32 = arith.constant 0 : i32
    %c0_i32_0 = arith.constant 0 : i32
    %c0_i32_1 = arith.constant 0 : i32
    return %c0_i32, %c0_i32_0 : i32, i32
  }
  func.func @transform_4(%arg0: i32) -> (i32, i32) {
    %c0_i32 = arith.constant 0 : i32
    %c0_i32_0 = arith.constant 0 : i32
    %c0_i32_1 = arith.constant 0 : i32
    return %c0_i32, %c0_i32_0 : i32, i32
  }
  func.func @transform_5(%arg0: i32) -> (i32, i32) {
    %c0_i32 = arith.constant 0 : i32
    %c0_i32_0 = arith.constant 0 : i32
    %c0_i32_1 = arith.constant 0 : i32
    return %c0_i32, %c0_i32_0 : i32, i32
  }
  func.func @transform_6(%arg0: i32) -> (i32, i32) {
    %c0_i32 = arith.constant 0 : i32
    %c0_i32_0 = arith.constant 0 : i32
    %c0_i32_1 = arith.constant 0 : i32
    return %c0_i32, %c0_i32_0 : i32, i32
  }
  func.func @transform_7(%arg0: i32) -> (i32, i32) {
    %c0_i32 = arith.constant 0 : i32
    %c0_i32_0 = arith.constant 0 : i32
    %c0_i32_1 = arith.constant 0 : i32
    return %c0_i32, %c0_i32_0 : i32, i32
  }
  func.func @transform_8(%arg0: i32) -> (i32, i32) {
    %c0_i32 = arith.constant 0 : i32
    %c0_i32_0 = arith.constant 0 : i32
    %c0_i32_1 = arith.constant 0 : i32
    return %c0_i32, %c0_i32_0 : i32, i32
  }
  func.func @transform_9(%arg0: i32) -> (i32, i32) {
    %c0_i32 = arith.constant 0 : i32
    %c0_i32_0 = arith.constant 0 : i32
    return %c0_i32, %arg0 : i32, i32
  }
}

</mosaic_0001>

<llo_original>
// kernel: tpu_custom_call.1
$region0: #{tpu_custom_call.1}
  #allocation0 [shape = 'u32[]', space=smem, size = 0x4, offset = 0x4, fixed_abs, tag = 'smem constant byte address 0x4 - core index']
  #allocation1 [shape = 'u32[72,128]{1,0:T(1,128)}', space=vmem, size = 0x9000, scoped, tag = 'internal scratch']
  #allocation2 [shape = 'f32[1,1]{1,0:T(1,128)S(1)}', space=vmem, size = 0x200, scoped, tag = 'scoped memory for tpu_custom_call.1']
  %s0 = inlined_call_operand.vmem [shape: f32[10,128], index: 0, kind: input, shape index: {}]
  %s1 = inlined_call_operand.vmem [shape: f32[10,128], index: 1, kind: input, shape index: {}]
  %s2 = inlined_call_operand.vmem [shape: f32[20,10], index: 2, kind: input, shape index: {}]
  %s3 = inlined_call_operand.vmem [shape: f32[20,10], index: 3, kind: input, shape index: {}]
  %s4 = inlined_call_operand.vmem [shape: f32[20,1], index: 4, kind: input, shape index: {}]
  %s5 = inlined_call_operand.vmem [shape: f32[10,20], index: 5, kind: input, shape index: {}]
  %s6 = inlined_call_operand.vmem [shape: f32[10,1], index: 6, kind: input, shape index: {}]
  %s7 = inlined_call_operand.vmem [shape: f32[10,1], index: 7, kind: input, shape index: {}]
  %s8 = inlined_call_operand.<no memory space> [shape: f32[1,1], index: 8, kind: input, shape index: {}]
  %s9 = inlined_call_operand.hbm [shape: f32[1,128], index: 9, kind: output, shape index: {}]
  %s10 = sld [smem:[#allocation0]]
  $region46: #{tpu_custom_call.1} parent=0
    _
  %s12 = ssub.s32 1, %s10
  %s13 = scalar_select 0, %s12, %s10
  %v14 = vstv %s8
  %15 = vst [vmem:[#allocation2] sm:$0x1] %v14
  $region1: #{tpu_custom_call.1} parent=0
    #allocation3 [shape = 'u8[512]{0}', space=vmem, size = 0x400, scoped, tag = 'output window, operand 0, single buffered']
    #allocation4 [shape = 's32[1]{0}', space=sflag, size = 0x4, scoped, tag = 'scoped memory for tpu_custom_call.1']
    %16 = vsyncpa [#allocation4], 0
    // Predicated region
    $region2: #{tpu_custom_call.1} parent=1 // pred_check
      _
    $region3: #{tpu_custom_call.1} parent=1 // pred_check_branch
      %18 = sbr.rel (0) target = $region5
    $region4: #{tpu_custom_call.1} parent=1 // pred_region
      _
    $region5: #{tpu_custom_call.1} parent=1 // pred_fallthru
      _
    // Predicated region
    $region6: #{tpu_custom_call.1} parent=1 // pred_check
      _
    $region7: #{tpu_custom_call.1} parent=1 // pred_check_branch
      %20 = sbr.rel (0) target = $region9
    $region8: #{tpu_custom_call.1} parent=1 // pred_region
      _
    $region9: #{tpu_custom_call.1} parent=1 // pred_fallthru
      _
    // Predicated region
    $region10: #{tpu_custom_call.1} parent=1 // pred_check
      _
    $region11: #{tpu_custom_call.1} parent=1 // pred_check_branch
      %22 = sbr.rel (0) target = $region13
    $region12: #{tpu_custom_call.1} parent=1 // pred_region
      _
    $region13: #{tpu_custom_call.1} parent=1 // pred_fallthru
      _
    // Predicated region
    $region14: #{tpu_custom_call.1} parent=1 // pred_check
      _
    $region15: #{tpu_custom_call.1} parent=1 // pred_check_branch
      %24 = sbr.rel (0) target = $region17
    $region16: #{tpu_custom_call.1} parent=1 // pred_region
      _
    $region17: #{tpu_custom_call.1} parent=1 // pred_fallthru
      _
    // Predicated region
    $region18: #{tpu_custom_call.1} parent=1 // pred_check
      _
    $region19: #{tpu_custom_call.1} parent=1 // pred_check_branch
      %26 = sbr.rel (0) target = $region21
    $region20: #{tpu_custom_call.1} parent=1 // pred_region
      _
    $region21: #{tpu_custom_call.1} parent=1 // pred_fallthru
      _
    // Predicated region
    $region22: #{tpu_custom_call.1} parent=1 // pred_check
      _
    $region23: #{tpu_custom_call.1} parent=1 // pred_check_branch
      %28 = sbr.rel (0) target = $region25
    $region24: #{tpu_custom_call.1} parent=1 // pred_region
      _
    $region25: #{tpu_custom_call.1} parent=1 // pred_fallthru
      _
    // Predicated region
    $region26: #{tpu_custom_call.1} parent=1 // pred_check
      _
    $region27: #{tpu_custom_call.1} parent=1 // pred_check_branch
      %30 = sbr.rel (0) target = $region29
    $region28: #{tpu_custom_call.1} parent=1 // pred_region
      _
    $region29: #{tpu_custom_call.1} parent=1 // pred_fallthru
      _
    // Predicated region
    $region30: #{tpu_custom_call.1} parent=1 // pred_check
      _
    $region31: #{tpu_custom_call.1} parent=1 // pred_check_branch
      %32 = sbr.rel (0) target = $region33
    $region32: #{tpu_custom_call.1} parent=1 // pred_region
      _
    $region33: #{tpu_custom_call.1} parent=1 // pred_fallthru
      _
    // Predicated region
    $region34: #{tpu_custom_call.1} parent=1 // pred_check
      _
    $region35: #{tpu_custom_call.1} parent=1 // pred_check_branch
      %34 = sbr.rel (0) target = $region37
    $region36: #{tpu_custom_call.1} parent=1 // pred_region
      _
    $region37: #{tpu_custom_call.1} parent=1 // pred_fallthru
      _
    %v35 = vld [vmem:[%s2] sm:$0xff]
    %v36 = vld [vmem:[%s2 + $0x8] sm:$0xff]
    %v37 = vld [vmem:[%s2 + $0x10] sm:$0xf]
    %v38 = vld [vmem:[%s0] sm:$0xff]
    %v39 = vld [vmem:[%s0 + $0x8] sm:$0x3]
    %v40 = vld [vmem:[%s3] sm:$0xff]
    %v41 = vld [vmem:[%s3 + $0x8] sm:$0xff]
    %v42 = vld [vmem:[%s3 + $0x10] sm:$0xf]
    %v43 = vld [vmem:[%s1] sm:$0xff]
    %v44 = vld [vmem:[%s1 + $0x8] sm:$0x3]
    %vm45 = vcmask 80896
    %v47 = vsel %vm45, %v40, 0
    %v50 = vsel %vm45, %v41, 0
    %v53 = vsel %vm45, %v42, 0
    %vm55 = vcmask 1041408
    %v57 = vsel %vm55, %v44, 0
    %59 = vmatpush.msra.mxu0 0.0
    %60 = vmatpush.msra.mxu0 0.0
    %61 = vmatpush.msra.mxu0 0.0
    %62 = vmatpush.msra.mxu0 0.0
    %63 = vmatpush.msra.mxu0 0.0
    %64 = vmatpush.msra.mxu0 0.0
    %65 = vmatpush.msra.mxu0 0.0
    %66 = vmatpush.msra.mxu0 0.0
    %67 = vmatpush.msra.mxu0 0.0
    %68 = vmatpush.msra.mxu0 0.0
    %69 = vmatpush.msra.mxu0 0.0
    %70 = vmatpush.msra.mxu0 0.0
    %71 = vmatpush.msra.mxu0 0.0
    %72 = vmatpush.msra.mxu0 0.0
    %73 = vmatpush.msra.mxu0 %v57
    %74 = vmatpush.msra.mxu0 %v43
    %75 = vmatmul.f32.gmra.mxu0 %v47
    %v76 = vpop.f32.mrf.mxu0
    %v77 = vadd.f32 0.0, %v76
    %78 = vmatmul.f32.gmra.mxu0 %v50
    %v79 = vpop.f32.mrf.mxu0
    %v80 = vadd.f32 0.0, %v79
    %81 = vmatmul.f32.gmra.mxu0 %v53
    %v82 = vpop.f32.mrf.mxu0
    %v83 = vadd.f32 0.0, %v82
    %84 = vdwg.mxu0
    %v86 = vsel %vm45, %v35, 0
    %v89 = vsel %vm45, %v36, 0
    %v92 = vsel %vm45, %v37, 0
    %v95 = vsel %vm55, %v39, 0
    %97 = vmatpush.msra.mxu0 0.0
    %98 = vmatpush.msra.mxu0 0.0
    %99 = vmatpush.msra.mxu0 0.0
    %100 = vmatpush.msra.mxu0 0.0
    %101 = vmatpush.msra.mxu0 0.0
    %102 = vmatpush.msra.mxu0 0.0
    %103 = vmatpush.msra.mxu0 0.0
    %104 = vmatpush.msra.mxu0 0.0
    %105 = vmatpush.msra.mxu0 0.0
    %106 = vmatpush.msra.mxu0 0.0
    %107 = vmatpush.msra.mxu0 0.0
    %108 = vmatpush.msra.mxu0 0.0
    %109 = vmatpush.msra.mxu0 0.0
    %110 = vmatpush.msra.mxu0 0.0
    %111 = vmatpush.msra.mxu0 %v95
    %112 = vmatpush.msra.mxu0 %v38
    %113 = vmatmul.f32.gmra.mxu0 %v86
    %v114 = vpop.f32.mrf.mxu0
    %v115 = vadd.f32 %v77, %v114
    %116 = vmatmul.f32.gmra.mxu0 %v89
    %v117 = vpop.f32.mrf.mxu0
    %v118 = vadd.f32 %v80, %v117
    %119 = vmatmul.f32.gmra.mxu0 %v92
    %v120 = vpop.f32.mrf.mxu0
    %v121 = vadd.f32 %v83, %v120
    %122 = vdwg.mxu0
    %v123 = vld [vmem:[%s4] sm:$0xff]
    %v124 = vld [vmem:[%s4 + $0x8] sm:$0xff]
    %v125 = vld [vmem:[%s4 + $0x10] sm:$0xf]
    %127 = vset.pattern.permute.xlu0 0
    %128 = vperm.xlu0 %127, %v123
    %v129 = vpop.permute.xlu0 %128
    %132 = vset.pattern.permute.xlu0 0
    %133 = vperm.xlu0 %132, %v124
    %v134 = vpop.permute.xlu0 %133
    %137 = vset.pattern.permute.xlu0 0
    %138 = vperm.xlu0 %137, %v125
    %v139 = vpop.permute.xlu0 %138
    %v141 = vadd.f32 %v115, %v129
    %v142 = vadd.f32 %v118, %v134
    %v143 = vadd.f32 %v121, %v139
    %v144 = vmax.f32 %v141, 0.0
    %v145 = vmax.f32 %v142, 0.0
    %v146 = vmax.f32 %v143, 0.0
    %v147 = vld [vmem:[%s5] sm:$0xff]
    %v148 = vld [vmem:[%s5 + $0x8] sm:$0x3]
    %v149 = vld [vmem:[%s6] sm:$0xff]
    %v150 = vld [vmem:[%s6 + $0x8] sm:$0x3]
    %152 = vset.pattern.permute.xlu0 0
    %153 = vperm.xlu0 %152, %v149
    %v154 = vpop.permute.xlu0 %153
    %157 = vset.pattern.permute.xlu0 0
    %158 = vperm.xlu0 %157, %v150
    %v159 = vpop.permute.xlu0 %158
    %vm161 = vcmask 162816
    %v163 = vsel %vm161, %v147, 0
    %v166 = vsel %vm161, %v148, 0
    %vm168 = vcmask 1043456
    %v170 = vsel %vm168, %v146, 0
    %172 = vmatpush.msra.mxu0 0.0
    %173 = vmatpush.msra.mxu0 0.0
    %174 = vmatpush.msra.mxu0 0.0
    %175 = vmatpush.msra.mxu0 0.0
    %176 = vmatpush.msra.mxu0 0.0
    %177 = vmatpush.msra.mxu0 0.0
    %178 = vmatpush.msra.mxu0 0.0
    %179 = vmatpush.msra.mxu0 0.0
    %180 = vmatpush.msra.mxu0 0.0
    %181 = vmatpush.msra.mxu0 0.0
    %182 = vmatpush.msra.mxu0 0.0
    %183 = vmatpush.msra.mxu0 0.0
    %184 = vmatpush.msra.mxu0 0.0
    %185 = vmatpush.msra.mxu0 %v170
    %186 = vmatpush.msra.mxu0 %v145
    %187 = vmatpush.msra.mxu0 %v144
    %188 = vmatmul.f32.gmra.mxu0 %v163
    %v189 = vpop.f32.mrf.mxu0
    %v190 = vadd.f32 %v154, %v189
    %191 = vmatmul.f32.gmra.mxu0 %v166
    %v192 = vpop.f32.mrf.mxu0
    %v193 = vadd.f32 %v159, %v192
    %194 = vdwg.mxu0
    %v195 = vmax.f32 %v190, 0.0
    %v196 = vmax.f32 %v193, 0.0
    %v197 = vld [vmem:[%s7] sm:$0xff]
    %v198 = vld [vmem:[%s7 + $0x8] sm:$0x3]
    %200 = vset.pattern.permute.xlu0 0
    %201 = vperm.xlu0 %200, %v197
    %v202 = vpop.permute.xlu0 %201
    %205 = vset.pattern.permute.xlu0 0
    %206 = vperm.xlu0 %205, %v198
    %v207 = vpop.permute.xlu0 %206
    %v209 = vmul.f32 %v195, %v202
    %v210 = vmul.f32 %v196, %v207
    %v211 = vsel %vm55, %v210, 0.0
    %v212 = vadd.f32 %v209, %v211
    %v213 = vrot.slane %v212, 4
    %v214 = vadd.f32 %v212, %v213
    %v215 = vrot.slane %v214, 2
    %v216 = vadd.f32 %v214, %v215
    %v217 = vrot.slane %v216, 1
    %v218 = vadd.f32 %v216, %v217
    %v219 = vld [vmem:[#allocation2] sm:$0x1]
    %221 = vset.pattern.permute.xlu0 0
    %222 = vperm.xlu0 %221, %v219
    %v223 = vpop.permute.xlu0 %222
    %v225 = vperm.slane %v223, 0
    %v226 = vadd.f32 %v218, %v225
    %227 = vst [vmem:[#allocation3] sm:$0x1] %v226
    // Predicated region
    $region38: #{tpu_custom_call.1} parent=1 // pred_check
      _
    $region39: #{tpu_custom_call.1} parent=1 // pred_check_branch
      %229 = sbr.rel (0) target = $region41
    $region40: #{tpu_custom_call.1} parent=1 // pred_region
      %231 = vsyncadd [#allocation4], 0
      %s233 = sshll.u32 [#allocation3], 4
      %s234 = int_to_ptr.vmem [resolvable:$true] %s233
      %s235 = sshll.u32 %s9, 4
      %s236 = int_to_ptr.hbm [resolvable:$true] %s235
      %238 = dma.vmem_to_hbm [thread:$0]  %s234, 16, %s236, [#allocation4]
    $region41: #{tpu_custom_call.1} parent=1 // pred_fallthru
      _
    // Predicated region
    $region42: #{tpu_custom_call.1} parent=1 // pred_check
      _
    $region43: #{tpu_custom_call.1} parent=1 // pred_check_branch
      %240 = sbr.rel (0) target = $region45
    $region44: #{tpu_custom_call.1} parent=1 // pred_region
      %242 = dma.done [#allocation4], 16
    $region45: #{tpu_custom_call.1} parent=1 // pred_fallthru
      _
    %243 = vsyncpa [#allocation4], 1

</llo_original>
